<compile_context>
chip_gen: v5e
topology: v5e:2x2
jax: 0.10.0
libtpu: 0.0.40
codegen_flags: <defaults>
</compile_context>

<pallas_src>
import jax
import jax.numpy as jnp
from jax.experimental import pallas as pl
from jax.experimental.pallas import tpu as pltpu


def _wc_kernel(x_ref, wq_ref, bq_ref, cb_ref, esqh_ref, out_ref):
    # x_ref:    (C, T)  NCHW slab: channels (sublane) x spatial tile (lane)
    # wq_ref:   (C, C)  quant_conv weight (out_ch, in_ch)
    # bq_ref:   (C, 1)  quant_conv bias (column vector)
    # cb_ref:   (K, C)  codebook (embedding weight)
    # esqh_ref: (K, 1)  precomputed 0.5 * ||e_k||^2
    # out_ref:  (C, T)  selected codebook rows, NCHW layout
    x = x_ref[...]
    wq = wq_ref[...]
    bq = bq_ref[...]
    cb = cb_ref[...]
    esqh = esqh_ref[...]

    # 1x1 conv == per-pixel linear:  q[c_out, j] = sum_ci Wq[c_out, ci] x[ci, j] + b
    q = jnp.dot(wq, x, preferred_element_type=jnp.float32) + bq           # (C, T)

    # F.normalize(dim=channel, eps=1e-12) fused into the score:
    #   e . (q / max(||q||, 1e-12)) == rsqrt(max(sum q^2, 1e-24)) * (e . q)
    sumsq = jnp.sum(q * q, axis=0, keepdims=True)                         # (1, T)
    inv_norm = jax.lax.rsqrt(jnp.maximum(sumsq, 1e-24))                   # (1, T), EUP

    cbq = jnp.dot(cb, q, preferred_element_type=jnp.float32)              # (K, T), MXU

    # Squared-distance argmin surrogate: 0.5*||e||^2 - inv_norm * (e . q).
    # Per-pixel ||qn||^2 is constant per pixel -> dropped; factor 2 folded.
    scores = esqh - inv_norm * cbq                                        # (K, T)

    # argmin over codebook entries, torch-style first-occurrence tie-break,
    # built from plain min-reductions (robust lowering on TPU).
    k_dim, t_dim = scores.shape
    min_score = jnp.min(scores, axis=0, keepdims=True)                    # (1, T)
    kk = jax.lax.broadcasted_iota(jnp.int32, (k_dim, t_dim), 0)           # (K, T)
    cand = jnp.where(scores == min_score, kk, k_dim)                      # ties -> lowest k
    idx = jnp.min(cand, axis=0, keepdims=True)                            # (1, T)
    onehot = (kk == idx).astype(jnp.float32)                              # (K, T)

    # gather codebook rows:  out[c, j] = sum_k cb[k, c] * onehot[k, j]  (MXU)
    out = jax.lax.dot_general(
        cb, onehot,
        dimension_numbers=(((0,), (0,)), ((), ())),
        preferred_element_type=jnp.float32)                               # (C, T)

    out_ref[...] = out.astype(out_ref.dtype)


def weather_codebook_forward(x_nchw, quant_w, quant_b, codebook, *, tile_hw=8192):
    """Inference forward of WeatherCodebook.

    x_nchw:   (B, C, H, W) float32
    quant_w:  (C, C)       1x1 conv weight (out, in)
    quant_b:  (C,)         1x1 conv bias
    codebook: (K, C)       embedding weight
    returns:  (B, C, H, W) weather_reference_feat
    """
    B, C, H, W = x_nchw.shape
    K = codebook.shape[0]
    HW = H * W

    # Lane-dense spatial tile: multiple of 128, capped at the rounded-up
    # spatial extent (so tiny spatial maps don't over-allocate).
    hw_rounded = pl.cdiv(HW, 128) * 128
    tile = max(128, min((int(tile_hw) // 128) * 128, hw_rounded))

    # NCHW -> (B, C, H*W): pure reshape, no transpose, no padding pass.
    x = x_nchw.reshape(B, C, HW)
    bq = quant_b.reshape(C, 1)
    esq_half = (0.5 * jnp.sum(codebook * codebook, axis=1)).reshape(K, 1)  # loop-invariant

    grid = (B, pl.cdiv(HW, tile))

    # Rough VMEM budget: double-buffered in/out slabs + live (C,T)/(K,T)
    # temporaries + resident weights, with 2x margin.  Clamp to [16, 48] MiB:
    # lifts v5e's 16 MiB scoped default, stays well under v7x's 64 MiB VMEM.
    vmem_need = 4 * (4 * C * tile          # double-buffered input + output slabs
                     + 3 * C * tile        # q, out, slack
                     + 5 * K * tile        # cbq/scores/cand/onehot/min
                     + 2 * (C * C + C + K * C + K))
    vmem_limit = int(min(max(2 * vmem_need, 16 << 20), 48 << 20))

    out = pl.pallas_call(
        _wc_kernel,
        out_shape=jax.ShapeDtypeStruct((B, C, HW), x_nchw.dtype),
        grid_spec=pltpu.PrefetchScalarGridSpec(
            num_scalar_prefetch=0,
            grid=grid,
            in_specs=[
                pl.BlockSpec((None, C, tile), lambda b, t: (b, 0, t)),   # x slab
                pl.BlockSpec((C, C), lambda b, t: (0, 0)),               # Wq (resident)
                pl.BlockSpec((C, 1), lambda b, t: (0, 0)),               # bias
                pl.BlockSpec((K, C), lambda b, t: (0, 0)),               # codebook
                pl.BlockSpec((K, 1), lambda b, t: (0, 0)),               # 0.5*||e||^2
            ],
            out_specs=pl.BlockSpec((None, C, tile), lambda b, t: (b, 0, t)),
        ),
        compiler_params=pltpu.CompilerParams(
            dimension_semantics=("parallel", "parallel"),
            vmem_limit_bytes=vmem_limit),
    )(x, quant_w, bq, codebook, esq_half)

    return out.reshape(B, C, H, W)


def _reference_forward(x_nchw, quant_w, quant_b, codebook):
    """Pure-JAX reference mirroring the PyTorch forward (inference branch)."""
    B, C, H, W = x_nchw.shape
    x_flat = jnp.transpose(x_nchw, (0, 2, 3, 1)).reshape(-1, C)
    q = x_flat @ quant_w.T + quant_b
    qn = q / jnp.maximum(jnp.linalg.norm(q, axis=1, keepdims=True), 1e-12)
    d2 = (jnp.sum(qn * qn, 1, keepdims=True)
          + jnp.sum(codebook * codebook, 1)[None, :]
          - 2.0 * qn @ codebook.T)
    idx = jnp.argmin(d2, axis=1)
    out = codebook[idx].reshape(B, H, W, C)
    return jnp.transpose(out, (0, 3, 1, 2))


if __name__ == "__main__":
    # Small shapes consistent with the module:
    #   channel == feature_dim (required for the view(-1, feature_dim) to work)
    B, C, H, W = 2, 32, 16, 16
    codebook_dim = 16          # number of codebook entries
    feature_dim = C

    key = jax.random.PRNGKey(0)
    kx, kw, kb, kc = jax.random.split(key, 4)

    x = jax.random.normal(kx, (B, C, H, W), dtype=jnp.float32)
    quant_w = 0.1 * jax.random.normal(kw, (C, C), dtype=jnp.float32)     # Conv2d 1x1
    quant_b = 0.01 * jax.random.normal(kb, (C,), dtype=jnp.float32)
    codebook = jax.random.normal(kc, (codebook_dim, feature_dim), dtype=jnp.float32)

    out = weather_codebook_forward(x, quant_w, quant_b, codebook)
    out = jax.block_until_ready(out)

    ref = jax.block_until_ready(_reference_forward(x, quant_w, quant_b, codebook))
    assert out.shape == (B, C, H, W)
    assert jnp.allclose(out, ref, atol=1e-5), "mismatch vs reference"

    print("KERNEL_OK")
</pallas_src>

<mosaic_0001>
module attributes {stable_mosaic.version = 11 : i64} {
  func.func @_wc_kernel(%arg0: i32, %arg1: i32, %arg2: memref<1x32x256xf32, #tpu.memory_space<vmem>>, %arg3: memref<32x32xf32, #tpu.memory_space<vmem>>, %arg4: memref<32x1xf32, #tpu.memory_space<vmem>>, %arg5: memref<16x32xf32, #tpu.memory_space<vmem>>, %arg6: memref<16x1xf32, #tpu.memory_space<vmem>>, %arg7: memref<1x32x256xf32, #tpu.memory_space<vmem>>) attributes {dimension_semantics = [#tpu.dimension_semantics<parallel>, #tpu.dimension_semantics<parallel>], iteration_bounds = array<i64: 2, 1>, scalar_prefetch = 0 : i64, scratch_operands = 0 : i64, tpu.core_type = #tpu.core_type<tc>, window_params = [{transform_indices = @transform_0, window_bounds = array<i64: 1, 32, 256>}, {pipeline_mode = #tpu.pipeline_mode<synchronous>, transform_indices = @transform_1, window_bounds = array<i64: 32, 32>}, {pipeline_mode = #tpu.pipeline_mode<synchronous>, transform_indices = @transform_2, window_bounds = array<i64: 32, 1>}, {pipeline_mode = #tpu.pipeline_mode<synchronous>, transform_indices = @transform_3, window_bounds = array<i64: 16, 32>}, {pipeline_mode = #tpu.pipeline_mode<synchronous>, transform_indices = @transform_4, window_bounds = array<i64: 16, 1>}, {transform_indices = @transform_5, window_bounds = array<i64: 1, 32, 256>}]} {
    %c0 = arith.constant 0 : index
    %c0_0 = arith.constant 0 : index
    %c0_1 = arith.constant 0 : index
    %0 = vector.load %arg2[%c0, %c0_0, %c0_1] : memref<1x32x256xf32, #tpu.memory_space<vmem>>, vector<1x32x256xf32>
    %1 = vector.shape_cast %0 : vector<1x32x256xf32> to vector<32x256xf32>
    %c0_2 = arith.constant 0 : index
    %c0_3 = arith.constant 0 : index
    %2 = vector.load %arg3[%c0_2, %c0_3] : memref<32x32xf32, #tpu.memory_space<vmem>>, vector<32x32xf32>
    %c0_4 = arith.constant 0 : index
    %c0_5 = arith.constant 0 : index
    %3 = vector.load %arg4[%c0_4, %c0_5] : memref<32x1xf32, #tpu.memory_space<vmem>>, vector<32x1xf32>
    %c0_6 = arith.constant 0 : index
    %c0_7 = arith.constant 0 : index
    %4 = vector.load %arg5[%c0_6, %c0_7] : memref<16x32xf32, #tpu.memory_space<vmem>>, vector<16x32xf32>
    %c0_8 = arith.constant 0 : index
    %c0_9 = arith.constant 0 : index
    %5 = vector.load %arg6[%c0_8, %c0_9] : memref<16x1xf32, #tpu.memory_space<vmem>>, vector<16x1xf32>
    %cst = arith.constant dense<0.000000e+00> : vector<32x256xf32>
    %6 = tpu.matmul %2, %1, %cst {dimension_numbers = #tpu.dot_dimension_numbers<[1], [0], [0], [1], [0, 0, 1, 1], [], []>} : vector<32x32xf32>, vector<32x256xf32>, vector<32x256xf32> -> vector<32x256xf32>
    %7 = vector.broadcast %3 : vector<32x1xf32> to vector<32x256xf32>
    %8 = arith.addf %6, %7 : vector<32x256xf32>
    %9 = arith.mulf %8, %8 : vector<32x256xf32>
    %cst_10 = arith.constant dense<0.000000e+00> : vector<256xf32>
    %10 = vector.multi_reduction <add>, %9, %cst_10 [0] : vector<32x256xf32> to vector<256xf32>
    %11 = vector.shape_cast %10 : vector<256xf32> to vector<1x256xf32>
    %cst_11 = arith.constant 1.000000e-24 : f32
    %12 = vector.broadcast %cst_11 : f32 to vector<1x256xf32>
    %13 = arith.maximumf %11, %12 : vector<1x256xf32>
    %14 = math.rsqrt %13 : vector<1x256xf32>
    %cst_12 = arith.constant dense<0.000000e+00> : vector<16x256xf32>
    %15 = tpu.matmul %4, %8, %cst_12 {dimension_numbers = #tpu.dot_dimension_numbers<[1], [0], [0], [1], [0, 0, 1, 1], [], []>} : vector<16x32xf32>, vector<32x256xf32>, vector<16x256xf32> -> vector<16x256xf32>
    %16 = vector.broadcast %14 : vector<1x256xf32> to vector<16x256xf32>
    %17 = arith.mulf %16, %15 : vector<16x256xf32>
    %18 = vector.broadcast %5 : vector<16x1xf32> to vector<16x256xf32>
    %19 = arith.subf %18, %17 : vector<16x256xf32>
    %cst_13 = arith.constant dense<0x7F800000> : vector<256xf32>
    %20 = vector.multi_reduction <minimumf>, %19, %cst_13 [0] : vector<16x256xf32> to vector<256xf32>
    %21 = vector.shape_cast %20 : vector<256xf32> to vector<1x256xf32>
    %22 = tpu.iota {dimensions = array<i32: 0>} : vector<16x256xi32>
    %23 = vector.broadcast %21 : vector<1x256xf32> to vector<16x256xf32>
    %24 = arith.cmpf oeq, %19, %23 : vector<16x256xf32>
    %c16_i32 = arith.constant 16 : i32
    %25 = vector.broadcast %c16_i32 : i32 to vector<16x256xi32>
    %26 = arith.select %24, %22, %25 : vector<16x256xi1>, vector<16x256xi32>
    %cst_14 = arith.constant dense<2147483647> : vector<256xi32>
    %27 = vector.multi_reduction <minsi>, %26, %cst_14 [0] : vector<16x256xi32> to vector<256xi32>
    %28 = vector.shape_cast %27 : vector<256xi32> to vector<1x256xi32>
    %29 = vector.broadcast %28 : vector<1x256xi32> to vector<16x256xi32>
    %30 = arith.cmpi eq, %22, %29 : vector<16x256xi32>
    %31 = arith.extui %30 : vector<16x256xi1> to vector<16x256xi32>
    %32 = arith.sitofp %31 : vector<16x256xi32> to vector<16x256xf32>
    %cst_15 = arith.constant dense<0.000000e+00> : vector<32x256xf32>
    %33 = tpu.matmul %4, %32, %cst_15 {dimension_numbers = #tpu.dot_dimension_numbers<[0], [0], [1], [1], [0, 1, 1, 1], [], []>} : vector<16x32xf32>, vector<16x256xf32>, vector<32x256xf32> -> vector<32x256xf32>
    %c0_16 = arith.constant 0 : index
    %c0_17 = arith.constant 0 : index
    %c0_18 = arith.constant 0 : index
    %34 = vector.load %arg7[%c0_16, %c0_17, %c0_18] : memref<1x32x256xf32, #tpu.memory_space<vmem>>, vector<1x32x256xf32>
    %35 = vector.shape_cast %34 : vector<1x32x256xf32> to vector<32x256xf32>
    %36 = vector.shape_cast %33 : vector<32x256xf32> to vector<1x32x256xf32>
    tpu.vector_store %arg7[%c0_16, %c0_17, %c0_18], %36 {strides = array<i32>} : memref<1x32x256xf32, #tpu.memory_space<vmem>>, vector<1x32x256xf32>,
    return
  }
  func.func @transform_0(%arg0: i32, %arg1: i32) -> (i32, i32, i32) {
    %c0_i32 = arith.constant 0 : i32
    %c0_i32_0 = arith.constant 0 : i32
    return %arg0, %c0_i32, %arg1 : i32, i32, i32
  }
  func.func @transform_1(%arg0: i32, %arg1: i32) -> (i32, i32) {
    %c0_i32 = arith.constant 0 : i32
    %c0_i32_0 = arith.constant 0 : i32
    %c0_i32_1 = arith.constant 0 : i32
    return %c0_i32, %c0_i32_0 : i32, i32
  }
  func.func @transform_2(%arg0: i32, %arg1: i32) -> (i32, i32) {
    %c0_i32 = arith.constant 0 : i32
    %c0_i32_0 = arith.constant 0 : i32
    %c0_i32_1 = arith.constant 0 : i32
    return %c0_i32, %c0_i32_0 : i32, i32
  }
  func.func @transform_3(%arg0: i32, %arg1: i32) -> (i32, i32) {
    %c0_i32 = arith.constant 0 : i32
    %c0_i32_0 = arith.constant 0 : i32
    %c0_i32_1 = arith.constant 0 : i32
    return %c0_i32, %c0_i32_0 : i32, i32
  }
  func.func @transform_4(%arg0: i32, %arg1: i32) -> (i32, i32) {
    %c0_i32 = arith.constant 0 : i32
    %c0_i32_0 = arith.constant 0 : i32
    %c0_i32_1 = arith.constant 0 : i32
    return %c0_i32, %c0_i32_0 : i32, i32
  }
  func.func @transform_5(%arg0: i32, %arg1: i32) -> (i32, i32, i32) {
    %c0_i32 = arith.constant 0 : i32
    %c0_i32_0 = arith.constant 0 : i32
    return %arg0, %c0_i32, %arg1 : i32, i32, i32
  }
}

</mosaic_0001>

<llo_original>
// kernel: tpu_custom_call.1
$region0: #{tpu_custom_call.1}
  #allocation0 [shape = 'u32[]', space=smem, size = 0x4, offset = 0x4, fixed_abs, tag = 'smem constant byte address 0x4 - core index']
  #allocation1 [shape = 'u32[72,128]{1,0:T(1,128)}', space=vmem, size = 0x9000, scoped, tag = 'internal scratch']
  %s0 = inlined_call_operand.hbm [shape: f32[2,32,256], index: 0, kind: input, shape index: {}]
  %s1 = inlined_call_operand.vmem [shape: f32[32,32], index: 1, kind: input, shape index: {}]
  %s2 = inlined_call_operand.vmem [shape: f32[32,1], index: 2, kind: input, shape index: {}]
  %s3 = inlined_call_operand.vmem [shape: f32[16,32], index: 3, kind: input, shape index: {}]
  %s4 = inlined_call_operand.vmem [shape: f32[16,1], index: 4, kind: input, shape index: {}]
  %s5 = inlined_call_operand.hbm [shape: f32[2,32,256], index: 5, kind: output, shape index: {}]
  %s6 = sld [smem:[#allocation0]]
  $region57: #{tpu_custom_call.1} parent=0
    _
  %s8 = ssub.s32 1, %s6
  %s9 = scalar_select 0, %s8, %s6
  $region1: #{tpu_custom_call.1} parent=0
    #allocation2 [shape = 'u8[65536]{0}', space=vmem, size = 0x10000, scoped, tag = 'input window, operand 0']
    #allocation3 [shape = 's32[2]{0}', space=sflag, size = 0x8, scoped, tag = 'scoped memory for tpu_custom_call.1']
    #allocation4 [shape = 's32[2]{0}', space=sflag, size = 0x8, scoped, tag = 'scoped memory for tpu_custom_call.1']
    #allocation5 [shape = 'u8[65536]{0}', space=vmem, size = 0x10000, scoped, tag = 'output window, operand 0']
    %10 = vsyncpa [#allocation3], 0
    %s11 = scalar_lea.sflag [#allocation3], 1
    %12 = vsyncpa %s11, 0
    %13 = vsyncpa [#allocation4], 0
    %s14 = scalar_lea.sflag [#allocation4], 1
    %15 = vsyncpa %s14, 0
    loop: start=0, step=1, limit=4
    $region2: #{tpu_custom_call.1} parent=1 // loop_pre_header
      _
    $region3: #{tpu_custom_call.1} parent=1 // loop_header
      %s17 = sphi 0, %s21
      %p18 = scmp.ge.s32.totalorder %s17, 4
      %s24 = sphi 0, %s36
      %s25 = sphi 0, %s32
      %s26 = sphi 0, %s24
      %s27 = sphi 0, %s25
      %s28 = sphi 0, %s26
      %s29 = sphi 0, %s27
      %s41 = sphi 0, %s43
      %s44 = sphi 0, %s41
      %s45 = sphi 0, %s44
      %s61 = sphi 0, %s45
      %s65 = sphi 0, %s65
      %s67 = sphi 0, %s65
      %s68 = sphi 0, %s67
      %s82 = sphi 0, %s68
      %s86 = sphi 0, %s86
      %s88 = sphi 0, %s86
      %s89 = sphi 0, %s88
      %s103 = sphi 0, %s89
      %s107 = sphi 0, %s107
      %s109 = sphi 0, %s107
      %s110 = sphi 0, %s109
      %s124 = sphi 0, %s110
      %s128 = sphi 0, %s128
      %s130 = sphi 0, %s128
      %s131 = sphi 0, %s130
      %s145 = sphi 0, %s131
      %s153 = sphi 0, %s155
      %s156 = sphi 0, %s153
      %s157 = sphi 0, %s156
      %s173 = sphi 0, %s157
    $region4: #{tpu_custom_call.1} parent=1 // loop_header_branch
      %20 = sbr.rel (%p18) target = $region8
    $region5: #{tpu_custom_call.1} parent=1 // loop_body
      %s22 = ssub.s32 %s17, 1
      %s23 = ssub.s32 %s17, 2
      %s30 = sadd.s32 1, %s25
      %p31 = scmp.ge.s32.totalorder %s30, 1
      %s32 = scalar_select %p31, 0, %s30
      %s33 = sadd.s32 1, %s24
      %s34 = scalar_select %p31, %s33, %s24
      %p35 = scmp.ge.s32.totalorder %s34, 2
      %s36 = scalar_select %p35, 0, %s34
      %s37 = ssub.s32 %s24, %s36
      %s38 = ssub.s32 %s25, %s32
      %s39 = sor.u32 %s37, %s38
      %p40 = scmp.eq.s32.totalorder %s39, 0
      %s42 = sadd.s32 %s41, 1
      %s43 = scalar_select %p40, %s41, %s42
      %p46 = pneg %p40
      %p47 = scmp.eq.s32.totalorder %s17, 1
      %p48 = por %p46, %p47
      %p49 = scmp.ne.s32.totalorder %s41, %s44
      %p50 = scmp.eq.s32.totalorder %s17, 0
      %p51 = por %p49, %p50
      %p52 = scmp.ne.s32.totalorder %s41, %s44
      %p53 = scmp.eq.s32.totalorder %s22, 1
      %p54 = por %p52, %p53
      %p55 = scmp.ne.s32.totalorder %s44, %s45
      %p56 = scmp.eq.s32.totalorder %s22, 0
      %p57 = por %p55, %p56
      %p58 = scmp.ne.s32.totalorder %s44, %s45
      %p59 = scmp.eq.s32.totalorder %s23, 1
      %p60 = por %p58, %p59
      %p62 = scmp.ne.s32.totalorder %s45, %s61
      %p63 = scmp.eq.s32.totalorder %s23, 0
      %p64 = por %p62, %p63
      %s66 = sadd.s32 %s65, 1
      %p69 = scmp.eq.s32.totalorder %s17, 1
      %p70 = scmp.ne.s32.totalorder %s65, %s67
      %p71 = scmp.eq.s32.totalorder %s17, 0
      %p72 = por %p70, %p71
      %p73 = scmp.ne.s32.totalorder %s65, %s67
      %p74 = scmp.eq.s32.totalorder %s22, 1
      %p75 = por %p73, %p74
      %p76 = scmp.ne.s32.totalorder %s67, %s68
      %p77 = scmp.eq.s32.totalorder %s22, 0
      %p78 = por %p76, %p77
      %p79 = scmp.ne.s32.totalorder %s67, %s68
      %p80 = scmp.eq.s32.totalorder %s23, 1
      %p81 = por %p79, %p80
      %p83 = scmp.ne.s32.totalorder %s68, %s82
      %p84 = scmp.eq.s32.totalorder %s23, 0
      %p85 = por %p83, %p84
      %s87 = sadd.s32 %s86, 1
      %p90 = scmp.eq.s32.totalorder %s17, 1
      %p91 = scmp.ne.s32.totalorder %s86, %s88
      %p92 = scmp.eq.s32.totalorder %s17, 0
      %p93 = por %p91, %p92
      %p94 = scmp.ne.s32.totalorder %s86, %s88
      %p95 = scmp.eq.s32.totalorder %s22, 1
      %p96 = por %p94, %p95
      %p97 = scmp.ne.s32.totalorder %s88, %s89
      %p98 = scmp.eq.s32.totalorder %s22, 0
      %p99 = por %p97, %p98
      %p100 = scmp.ne.s32.totalorder %s88, %s89
      %p101 = scmp.eq.s32.totalorder %s23, 1
      %p102 = por %p100, %p101
      %p104 = scmp.ne.s32.totalorder %s89, %s103
      %p105 = scmp.eq.s32.totalorder %s23, 0
      %p106 = por %p104, %p105
      %s108 = sadd.s32 %s107, 1
      %p111 = scmp.eq.s32.totalorder %s17, 1
      %p112 = scmp.ne.s32.totalorder %s107, %s109
      %p113 = scmp.eq.s32.totalorder %s17, 0
      %p114 = por %p112, %p113
      %p115 = scmp.ne.s32.totalorder %s107, %s109
      %p116 = scmp.eq.s32.totalorder %s22, 1
      %p117 = por %p115, %p116
      %p118 = scmp.ne.s32.totalorder %s109, %s110
      %p119 = scmp.eq.s32.totalorder %s22, 0
      %p120 = por %p118, %p119
      %p121 = scmp.ne.s32.totalorder %s109, %s110
      %p122 = scmp.eq.s32.totalorder %s23, 1
      %p123 = por %p121, %p122
      %p125 = scmp.ne.s32.totalorder %s110, %s124
      %p126 = scmp.eq.s32.totalorder %s23, 0
      %p127 = por %p125, %p126
      %s129 = sadd.s32 %s128, 1
      %p132 = scmp.eq.s32.totalorder %s17, 1
      %p133 = scmp.ne.s32.totalorder %s128, %s130
      %p134 = scmp.eq.s32.totalorder %s17, 0
      %p135 = por %p133, %p134
      %p136 = scmp.ne.s32.totalorder %s128, %s130
      %p137 = scmp.eq.s32.totalorder %s22, 1
      %p138 = por %p136, %p137
      %p139 = scmp.ne.s32.totalorder %s130, %s131
      %p140 = scmp.eq.s32.totalorder %s22, 0
      %p141 = por %p139, %p140
      %p142 = scmp.ne.s32.totalorder %s130, %s131
      %p143 = scmp.eq.s32.totalorder %s23, 1
      %p144 = por %p142, %p143
      %p146 = scmp.ne.s32.totalorder %s131, %s145
      %p147 = scmp.eq.s32.totalorder %s23, 0
      %p148 = por %p146, %p147
      %s149 = ssub.s32 %s24, %s36
      %s150 = ssub.s32 %s25, %s32
      %s151 = sor.u32 %s149, %s150
      %p152 = scmp.eq.s32.totalorder %s151, 0
      %s154 = sadd.s32 %s153, 1
      %s155 = scalar_select %p152, %s153, %s154
      %p158 = pneg %p152
      %p159 = scmp.eq.s32.totalorder %s17, 1
      %p160 = por %p158, %p159
      %p161 = scmp.ne.s32.totalorder %s153, %s156
      %p162 = scmp.eq.s32.totalorder %s17, 0
      %p163 = por %p161, %p162
      %p164 = scmp.ne.s32.totalorder %s153, %s156
      %p165 = scmp.eq.s32.totalorder %s22, 1
      %p166 = por %p164, %p165
      %p167 = scmp.ne.s32.totalorder %s156, %s157
      %p168 = scmp.eq.s32.totalorder %s22, 0
      %p169 = por %p167, %p168
      %p170 = scmp.ne.s32.totalorder %s156, %s157
      %p171 = scmp.eq.s32.totalorder %s23, 1
      %p172 = por %p170, %p171
      %p174 = scmp.ne.s32.totalorder %s157, %s173
      %p175 = scmp.eq.s32.totalorder %s23, 0
      %p176 = por %p174, %p175
      %p177 = scmp.le.s32.totalorder 1, %s17
      %p178 = scmp.lt.s32.totalorder %s17, 3
      %p179 = pnand %p177, %p178
      %p180 = pneg %p179
      // Predicated region
      $region9: #{tpu_custom_call.1} parent=5 // pred_check
        _
      $region10: #{tpu_custom_call.1} parent=5 // pred_check_branch
        %182 = sbr.rel (%p179) target = $region12
      $region11: #{tpu_custom_call.1} parent=5 // pred_region
        %s183 = ssub.s32 %s17, 1
        // Predicated region
        $region13: #{tpu_custom_call.1} parent=11 // pred_check
          %p184 = pneg %p78
        $region14: #{tpu_custom_call.1} parent=11 // pred_check_branch
          %186 = sbr.rel (%p184) target = $region16
        $region15: #{tpu_custom_call.1} parent=11 // pred_region
          _
        $region16: #{tpu_custom_call.1} parent=11 // pred_fallthru
          _
        // Predicated region
        $region17: #{tpu_custom_call.1} parent=11 // pred_check
          %p187 = pneg %p99
        $region18: #{tpu_custom_call.1} parent=11 // pred_check_branch
          %189 = sbr.rel (%p187) target = $region20
        $region19: #{tpu_custom_call.1} parent=11 // pred_region
          _
        $region20: #{tpu_custom_call.1} parent=11 // pred_fallthru
          _
        // Predicated region
        $region21: #{tpu_custom_call.1} parent=11 // pred_check
          %p190 = pneg %p120
        $region22: #{tpu_custom_call.1} parent=11 // pred_check_branch
          %192 = sbr.rel (%p190) target = $region24
        $region23: #{tpu_custom_call.1} parent=11 // pred_region
          _
        $region24: #{tpu_custom_call.1} parent=11 // pred_fallthru
          _
        // Predicated region
        $region25: #{tpu_custom_call.1} parent=11 // pred_check
          %p193 = pneg %p141
        $region26: #{tpu_custom_call.1} parent=11 // pred_check_branch
          %195 = sbr.rel (%p193) target = $region28
        $region27: #{tpu_custom_call.1} parent=11 // pred_region
          _
        $region28: #{tpu_custom_call.1} parent=11 // pred_fallthru
          _
      $region12: #{tpu_custom_call.1} parent=5 // pred_fallthru
        _
      %p196 = scmp.lt.s32.totalorder %s17, 2
      // Predicated region
      $region29: #{tpu_custom_call.1} parent=5 // pred_check
        %p197 = pneg %p196
      $region30: #{tpu_custom_call.1} parent=5 // pred_check_branch
        %199 = sbr.rel (%p197) target = $region32
      $region31: #{tpu_custom_call.1} parent=5 // pred_region
        // Predicated region
        $region33: #{tpu_custom_call.1} parent=31 // pred_check
          %p200 = pneg %p51
        $region34: #{tpu_custom_call.1} parent=31 // pred_check_branch
          %202 = sbr.rel (%p200) target = $region36
        $region35: #{tpu_custom_call.1} parent=31 // pred_region
          %s203 = sand.u32 %s41, 1
          %s204 = scalar_lea.sflag [#allocation3], %s203
          %s205 = sand.u32 %s41, 1
          %s206 = smul.addr %s205, 64
          %s207 = scalar_lea.vmem [#allocation2], %s206
          %s208 = smul.u32 2, %s25
          %210 = vsyncadd %s204, 0
          %s211 = smul.addr %s24, 8
          %s212 = sadd.s32 %s208, %s211
          %s213 = smul.addr %s212, 8
          %s214 = scalar_lea.hbm %s0, %s213
          %s215 = sshll.u32 %s214, 4
          %s216 = int_to_ptr.hbm [resolvable:$true] %s215
          %s217 = sshll.u32 %s207, 4
          %s218 = int_to_ptr.vmem [resolvable:$true] %s217
          %223 = dma.hbm_to_vmem [thread:$0]  %s216, 1024, %s218, %s204, 256, 256, 16
        $region36: #{tpu_custom_call.1} parent=31 // pred_fallthru
          _
      $region32: #{tpu_custom_call.1} parent=5 // pred_fallthru
        _
      %p224 = scmp.le.s32.totalorder 1, %s17
      %p225 = scmp.lt.s32.totalorder %s17, 3
      %p226 = pnand %p224, %p225
      %p227 = pneg %p226
      // Predicated region
      $region37: #{tpu_custom_call.1} parent=5 // pred_check
        _
      $region38: #{tpu_custom_call.1} parent=5 // pred_check_branch
        %229 = sbr.rel (%p226) target = $region40
      $region39: #{tpu_custom_call.1} parent=5 // pred_region
        %s230 = ssub.s32 %s17, 1
        %s231 = sand.u32 %s44, 1
        %s232 = scalar_lea.sflag [#allocation3], %s231
        %s233 = sand.u32 %s44, 1
        %s234 = smul.addr %s233, 64
        %s235 = scalar_lea.vmem [#allocation2], %s234
        // Predicated region
        $region41: #{tpu_custom_call.1} parent=39 // pred_check
          %p236 = pneg %p57
        $region42: #{tpu_custom_call.1} parent=39 // pred_check_branch
          %238 = sbr.rel (%p236) target = $region44
        $region43: #{tpu_custom_call.1} parent=39 // pred_region
          %240 = dma.done %s232, 1024
        $region44: #{tpu_custom_call.1} parent=39 // pred_fallthru
          _
        %s241 = sand.u32 %s44, 1
        %s242 = scalar_lea.sflag [#allocation3], %s241
        %s243 = sand.u32 %s44, 1
        %s244 = smul.addr %s243, 64
        %s245 = scalar_lea.vmem [#allocation2], %s244
        %p246 = pneg %p57
        %p247 = pneg %p54
        %p248 = pneg %p78
        %p249 = pneg %p75
        %p250 = pneg %p99
        %p251 = pneg %p96
        %p252 = pneg %p120
        %p253 = pneg %p117
        %p254 = pneg %p141
        %p255 = pneg %p138
        %p256 = pneg %p169
        %p257 = pneg %p166
        %s258 = sand.u32 %s156, 1
        %s259 = scalar_lea.sflag [#allocation4], %s258
        %s260 = sand.u32 %s156, 1
        %s261 = smul.addr %s260, 64
        %s262 = scalar_lea.vmem [#allocation5], %s261
        %s263 = smul.u32 2, %s27
        %s264 = smul.u32 2, %s27
        %v265 = vld [vmem:[%s235] sm:$0xff]
        %v266 = vld [vmem:[%s235 + $0x8] sm:$0xff]
        %v267 = vld [vmem:[%s235 + $0x10] sm:$0xff]
        %v268 = vld [vmem:[%s235 + $0x18] sm:$0xff]
        %v269 = vld [vmem:[%s235 + $0x20] sm:$0xff]
        %v270 = vld [vmem:[%s235 + $0x28] sm:$0xff]
        %v271 = vld [vmem:[%s235 + $0x30] sm:$0xff]
        %v272 = vld [vmem:[%s235 + $0x38] sm:$0xff]
        %v273 = vld [vmem:[%s1] sm:$0xff]
        %v274 = vld [vmem:[%s1 + $0x8] sm:$0xff]
        %v275 = vld [vmem:[%s1 + $0x10] sm:$0xff]
        %v276 = vld [vmem:[%s1 + $0x18] sm:$0xff]
        %v277 = vld [vmem:[%s2] sm:$0xff]
        %v278 = vld [vmem:[%s2 + $0x8] sm:$0xff]
        %v279 = vld [vmem:[%s2 + $0x10] sm:$0xff]
        %v280 = vld [vmem:[%s2 + $0x18] sm:$0xff]
        %v281 = vld [vmem:[%s3] sm:$0xff]
        %v282 = vld [vmem:[%s3 + $0x8] sm:$0xff]
        %v283 = vld [vmem:[%s4] sm:$0xff]
        %v284 = vld [vmem:[%s4 + $0x8] sm:$0xff]
        %286 = vset.pattern.permute.xlu0 0
        %287 = vperm.xlu0 %286, %v277
        %v288 = vpop.permute.xlu0 %287
        %291 = vset.pattern.permute.xlu0 0
        %292 = vperm.xlu0 %291, %v278
        %v293 = vpop.permute.xlu0 %292
        %296 = vset.pattern.permute.xlu0 0
        %297 = vperm.xlu0 %296, %v279
        %v298 = vpop.permute.xlu0 %297
        %301 = vset.pattern.permute.xlu0 0
        %302 = vperm.xlu0 %301, %v280
        %v303 = vpop.permute.xlu0 %302
        %vm305 = vcmask 261120
        %v307 = vsel %vm305, %v273, 0
        %v310 = vsel %vm305, %v274, 0
        %v313 = vsel %vm305, %v275, 0
        %v316 = vsel %vm305, %v276, 0
        %318 = vmatpush.msra.mxu0 0.0
        %319 = vmatpush.msra.mxu0 0.0
        %320 = vmatpush.msra.mxu0 0.0
        %321 = vmatpush.msra.mxu0 0.0
        %322 = vmatpush.msra.mxu0 0.0
        %323 = vmatpush.msra.mxu0 0.0
        %324 = vmatpush.msra.mxu0 0.0
        %325 = vmatpush.msra.mxu0 0.0
        %326 = vmatpush.msra.mxu0 0.0
        %327 = vmatpush.msra.mxu0 0.0
        %328 = vmatpush.msra.mxu0 0.0
        %329 = vmatpush.msra.mxu0 0.0
        %330 = vmatpush.msra.mxu0 %v271
        %331 = vmatpush.msra.mxu0 %v269
        %332 = vmatpush.msra.mxu0 %v267
        %333 = vmatpush.msra.mxu0 %v265
        %334 = vmatmul.f32.gmra.mxu0 %v307
        %v335 = vpop.f32.mrf.mxu0
        %v336 = vadd.f32 %v288, %v335
        %337 = vmatmul.f32.gmra.mxu0 %v310
        %v338 = vpop.f32.mrf.mxu0
        %v339 = vadd.f32 %v293, %v338
        %340 = vmatmul.f32.gmra.mxu0 %v313
        %v341 = vpop.f32.mrf.mxu0
        %v342 = vadd.f32 %v298, %v341
        %343 = vmatmul.f32.gmra.mxu0 %v316
        %v344 = vpop.f32.mrf.mxu0
        %v345 = vadd.f32 %v303, %v344
        %346 = vdwg.mxu0
        %347 = vmatpush.msra.mxu0 0.0
        %348 = vmatpush.msra.mxu0 0.0
        %349 = vmatpush.msra.mxu0 0.0
        %350 = vmatpush.msra.mxu0 0.0
        %351 = vmatpush.msra.mxu0 0.0
        %352 = vmatpush.msra.mxu0 0.0
        %353 = vmatpush.msra.mxu0 0.0
        %354 = vmatpush.msra.mxu0 0.0
        %355 = vmatpush.msra.mxu0 0.0
        %356 = vmatpush.msra.mxu0 0.0
        %357 = vmatpush.msra.mxu0 0.0
        %358 = vmatpush.msra.mxu0 0.0
        %359 = vmatpush.msra.mxu0 %v272
        %360 = vmatpush.msra.mxu0 %v270
        %361 = vmatpush.msra.mxu0 %v268
        %362 = vmatpush.msra.mxu0 %v266
        %363 = vmatmul.f32.gmra.mxu0 %v307
        %v364 = vpop.f32.mrf.mxu0
        %v365 = vadd.f32 %v288, %v364
        %366 = vmatmul.f32.gmra.mxu0 %v310
        %v367 = vpop.f32.mrf.mxu0
        %v368 = vadd.f32 %v293, %v367
        %369 = vmatmul.f32.gmra.mxu0 %v313
        %v370 = vpop.f32.mrf.mxu0
        %v371 = vadd.f32 %v298, %v370
        %372 = vmatmul.f32.gmra.mxu0 %v316
        %v373 = vpop.f32.mrf.mxu0
        %v374 = vadd.f32 %v303, %v373
        %375 = vdwg.mxu0
        %v376 = vmul.f32 %v336, %v336
        %v377 = vmul.f32 %v365, %v365
        %v378 = vmul.f32 %v339, %v339
        %v379 = vmul.f32 %v368, %v368
        %v380 = vmul.f32 %v342, %v342
        %v381 = vmul.f32 %v371, %v371
        %v382 = vmul.f32 %v345, %v345
        %v383 = vmul.f32 %v374, %v374
        %v384 = vadd.f32 %v376, %v378
        %v385 = vadd.f32 %v384, %v380
        %v386 = vadd.f32 %v385, %v382
        %v387 = vrot.slane %v386, 4
        %v388 = vadd.f32 %v386, %v387
        %v389 = vrot.slane %v388, 2
        %v390 = vadd.f32 %v388, %v389
        %v391 = vrot.slane %v390, 1
        %v392 = vadd.f32 %v390, %v391
        %v393 = vadd.f32 %v377, %v379
        %v394 = vadd.f32 %v393, %v381
        %v395 = vadd.f32 %v394, %v383
        %v396 = vrot.slane %v395, 4
        %v397 = vadd.f32 %v395, %v396
        %v398 = vrot.slane %v397, 2
        %v399 = vadd.f32 %v397, %v398
        %v400 = vrot.slane %v399, 1
        %v401 = vadd.f32 %v399, %v400
        %v402 = vmax.f32 %v392, 1e-24
        %v403 = vmax.f32 %v401, 1e-24
        %v404 = vrsqrt.pop %v402
        %v405 = vmul.f32 %v404, %v402
        %v406 = vmul.f32 %v405, %v404
        %v407 = vmul.f32 0.5, %v406
        %v408 = vsub.f32 1.5, %v407
        %v409 = vmul.f32 %v404, %v408
        %vm410 = vweird.f32 %v402
        %vm411 = vweird.f32 %v404
        %vm412 = vmor %vm410, %vm411
        %v413 = vsel %vm412, %v404, %v409
        %v414 = vrsqrt.pop %v403
        %v415 = vmul.f32 %v414, %v403
        %v416 = vmul.f32 %v415, %v414
        %v417 = vmul.f32 0.5, %v416
        %v418 = vsub.f32 1.5, %v417
        %v419 = vmul.f32 %v414, %v418
        %vm420 = vweird.f32 %v403
        %vm421 = vweird.f32 %v414
        %vm422 = vmor %vm420, %vm421
        %v423 = vsel %vm422, %v414, %v419
        %v425 = vsel %vm305, %v281, 0
        %v428 = vsel %vm305, %v282, 0
        %430 = vmatpush.msra.mxu0 0.0
        %431 = vmatpush.msra.mxu0 0.0
        %432 = vmatpush.msra.mxu0 0.0
        %433 = vmatpush.msra.mxu0 0.0
        %434 = vmatpush.msra.mxu0 0.0
        %435 = vmatpush.msra.mxu0 0.0
        %436 = vmatpush.msra.mxu0 0.0
        %437 = vmatpush.msra.mxu0 0.0
        %438 = vmatpush.msra.mxu0 0.0
        %439 = vmatpush.msra.mxu0 0.0
        %440 = vmatpush.msra.mxu0 0.0
        %441 = vmatpush.msra.mxu0 0.0
        %442 = vmatpush.msra.mxu0 %v345
        %443 = vmatpush.msra.mxu0 %v342
        %444 = vmatpush.msra.mxu0 %v339
        %445 = vmatpush.msra.mxu0 %v336
        %446 = vmatmul.f32.gmra.mxu0 %v425
        %v447 = vpop.f32.mrf.mxu0
        %v448 = vadd.f32 0.0, %v447
        %449 = vmatmul.f32.gmra.mxu0 %v428
        %v450 = vpop.f32.mrf.mxu0
        %v451 = vadd.f32 0.0, %v450
        %452 = vdwg.mxu0
        %453 = vmatpush.msra.mxu0 0.0
        %454 = vmatpush.msra.mxu0 0.0
        %455 = vmatpush.msra.mxu0 0.0
        %456 = vmatpush.msra.mxu0 0.0
        %457 = vmatpush.msra.mxu0 0.0
        %458 = vmatpush.msra.mxu0 0.0
        %459 = vmatpush.msra.mxu0 0.0
        %460 = vmatpush.msra.mxu0 0.0
        %461 = vmatpush.msra.mxu0 0.0
        %462 = vmatpush.msra.mxu0 0.0
        %463 = vmatpush.msra.mxu0 0.0
        %464 = vmatpush.msra.mxu0 0.0
        %465 = vmatpush.msra.mxu0 %v374
        %466 = vmatpush.msra.mxu0 %v371
        %467 = vmatpush.msra.mxu0 %v368
        %468 = vmatpush.msra.mxu0 %v365
        %469 = vmatmul.f32.gmra.mxu0 %v425
        %v470 = vpop.f32.mrf.mxu0
        %v471 = vadd.f32 0.0, %v470
        %472 = vmatmul.f32.gmra.mxu0 %v428
        %v473 = vpop.f32.mrf.mxu0
        %v474 = vadd.f32 0.0, %v473
        %475 = vdwg.mxu0
        %v476 = vmul.f32 %v413, %v448
        %v477 = vmul.f32 %v423, %v471
        %v478 = vmul.f32 %v413, %v451
        %v479 = vmul.f32 %v423, %v474
        %481 = vset.pattern.permute.xlu0 0
        %482 = vperm.xlu0 %481, %v283
        %v483 = vpop.permute.xlu0 %482
        %486 = vset.pattern.permute.xlu0 0
        %487 = vperm.xlu0 %486, %v284
        %v488 = vpop.permute.xlu0 %487
        %v490 = vsub.f32 %v483, %v476
        %v491 = vsub.f32 %v483, %v477
        %v492 = vsub.f32 %v488, %v478
        %v493 = vsub.f32 %v488, %v479
        %v494 = vmin.f32 %v490, %v492
        %v495 = vrot.slane %v494, 4
        %v496 = vmin.f32 %v494, %v495
        %v497 = vrot.slane %v496, 2
        %v498 = vmin.f32 %v496, %v497
        %v499 = vrot.slane %v498, 1
        %v500 = vmin.f32 %v498, %v499
        %v501 = vmin.f32 %v491, %v493
        %v502 = vrot.slane %v501, 4
        %v503 = vmin.f32 %v501, %v502
        %v504 = vrot.slane %v503, 2
        %v505 = vmin.f32 %v503, %v504
        %v506 = vrot.slane %v505, 1
        %v507 = vmin.f32 %v505, %v506
        %v508 = vlaneseq
        %v509 = vshrl.u32 %v508, 7
        %v510 = vadd.s32 %v509, 8
        %vm511 = vcmp.eq.f32.partialorder %v490, %v500
        %vm512 = vcmp.eq.f32.partialorder %v491, %v507
        %vm513 = vcmp.eq.f32.partialorder %v492, %v500
        %vm514 = vcmp.eq.f32.partialorder %v493, %v507
        %v515 = vsel %vm511, %v509, 16
        %v516 = vsel %vm512, %v509, 16
        %v517 = vsel %vm513, %v510, 16
        %v518 = vsel %vm514, %v510, 16
        %vm519 = vcmp.lt.s32.totalorder %v515, %v517
        %v520 = vsel %vm519, %v515, %v517
        %v521 = vrot.slane %v520, 4
        %vm522 = vcmp.lt.s32.totalorder %v520, %v521
        %v523 = vsel %vm522, %v520, %v521
        %v524 = vrot.slane %v523, 2
        %vm525 = vcmp.lt.s32.totalorder %v523, %v524
        %v526 = vsel %vm525, %v523, %v524
        %v527 = vrot.slane %v526, 1
        %vm528 = vcmp.lt.s32.totalorder %v526, %v527
        %v529 = vsel %vm528, %v526, %v527
        %vm530 = vcmp.lt.s32.totalorder %v516, %v518
        %v531 = vsel %vm530, %v516, %v518
        %v532 = vrot.slane %v531, 4
        %vm533 = vcmp.lt.s32.totalorder %v531, %v532
        %v534 = vsel %vm533, %v531, %v532
        %v535 = vrot.slane %v534, 2
        %vm536 = vcmp.lt.s32.totalorder %v534, %v535
        %v537 = vsel %vm536, %v534, %v535
        %v538 = vrot.slane %v537, 1
        %vm539 = vcmp.lt.s32.totalorder %v537, %v538
        %v540 = vsel %vm539, %v537, %v538
        %vm541 = vcmp.eq.s32.totalorder %v509, %v529
        %vm542 = vcmp.eq.s32.totalorder %v509, %v540
        %vm543 = vcmp.eq.s32.totalorder %v510, %v529
        %vm544 = vcmp.eq.s32.totalorder %v510, %v540
        %v545 = vsel %vm541, 1, 0
        %v546 = vsel %vm542, 1, 0
        %v547 = vsel %vm543, 1, 0
        %v548 = vsel %vm544, 1, 0
        %v549 = vcvt.s32.f32 %v545
        %v550 = vcvt.s32.f32 %v546
        %v551 = vcvt.s32.f32 %v547
        %v552 = vcvt.s32.f32 %v548
        %553 = vxpose.xlu0.b32.start [1/16] %v281, 128
        %554 = vxpose.xlu0.b32.cont [2/16] %v282, 128
        %555 = vxpose.xlu0.b32.cont [3/16] 0.0, 128
        %556 = vxpose.xlu0.b32.cont [4/16] 0.0, 128
        %557 = vxpose.xlu0.b32.cont [5/16] 0.0, 128
        %558 = vxpose.xlu0.b32.cont [6/16] 0.0, 128
        %559 = vxpose.xlu0.b32.cont [7/16] 0.0, 128
        %560 = vxpose.xlu0.b32.cont [8/16] 0.0, 128
        %561 = vxpose.xlu0.b32.cont [9/16] 0.0, 128
        %562 = vxpose.xlu0.b32.cont [10/16] 0.0, 128
        %563 = vxpose.xlu0.b32.cont [11/16] 0.0, 128
        %564 = vxpose.xlu0.b32.cont [12/16] 0.0, 128
        %565 = vxpose.xlu0.b32.cont [13/16] 0.0, 128
        %566 = vxpose.xlu0.b32.cont [14/16] 0.0, 128
        %567 = vxpose.xlu0.b32.cont [15/16] 0.0, 128
        %568 = vxpose.xlu0.b32.end [16/16] 0.0, 128
        %v569 = vpop.trf.xlu0
        %v570 = vpop.trf.xlu0
        %v571 = vpop.trf.xlu0
        %v572 = vpop.trf.xlu0
        %v573 = vpop.trf.xlu0
        %v574 = vpop.trf.xlu0
        %v575 = vpop.trf.xlu0
        %v576 = vpop.trf.xlu0
        %v577 = vpop.trf.xlu0
        %v578 = vpop.trf.xlu0
        %v579 = vpop.trf.xlu0
        %v580 = vpop.trf.xlu0
        %v581 = vpop.trf.xlu0
        %v582 = vpop.trf.xlu0
        %v583 = vpop.trf.xlu0
        %v584 = vpop.trf.xlu0
        %vm585 = vcmask 130048
        %v587 = vsel %vm585, %v569, 0
        %v590 = vsel %vm585, %v570, 0
        %v593 = vsel %vm585, %v571, 0
        %v596 = vsel %vm585, %v572, 0
        %598 = vmatpush.msra.mxu0 0.0
        %599 = vmatpush.msra.mxu0 0.0
        %600 = vmatpush.msra.mxu0 0.0
        %601 = vmatpush.msra.mxu0 0.0
        %602 = vmatpush.msra.mxu0 0.0
        %603 = vmatpush.msra.mxu0 0.0
        %604 = vmatpush.msra.mxu0 0.0
        %605 = vmatpush.msra.mxu0 0.0
        %606 = vmatpush.msra.mxu0 0.0
        %607 = vmatpush.msra.mxu0 0.0
        %608 = vmatpush.msra.mxu0 0.0
        %609 = vmatpush.msra.mxu0 0.0
        %610 = vmatpush.msra.mxu0 0.0
        %611 = vmatpush.msra.mxu0 0.0
        %612 = vmatpush.msra.mxu0 %v551
        %613 = vmatpush.msra.mxu0 %v549
        %614 = vmatmul.f32.gmra.mxu0 %v587
        %v615 = vpop.f32.mrf.mxu0
        %v616 = vadd.f32 0.0, %v615
        %617 = vmatmul.f32.gmra.mxu0 %v590
        %v618 = vpop.f32.mrf.mxu0
        %v619 = vadd.f32 0.0, %v618
        %620 = vmatmul.f32.gmra.mxu0 %v593
        %v621 = vpop.f32.mrf.mxu0
        %v622 = vadd.f32 0.0, %v621
        %623 = vmatmul.f32.gmra.mxu0 %v596
        %v624 = vpop.f32.mrf.mxu0
        %v625 = vadd.f32 0.0, %v624
        %626 = vdwg.mxu0
        %627 = vmatpush.msra.mxu0 0.0
        %628 = vmatpush.msra.mxu0 0.0
        %629 = vmatpush.msra.mxu0 0.0
        %630 = vmatpush.msra.mxu0 0.0
        %631 = vmatpush.msra.mxu0 0.0
        %632 = vmatpush.msra.mxu0 0.0
        %633 = vmatpush.msra.mxu0 0.0
        %634 = vmatpush.msra.mxu0 0.0
        %635 = vmatpush.msra.mxu0 0.0
        %636 = vmatpush.msra.mxu0 0.0
        %637 = vmatpush.msra.mxu0 0.0
        %638 = vmatpush.msra.mxu0 0.0
        %639 = vmatpush.msra.mxu0 0.0
        %640 = vmatpush.msra.mxu0 0.0
        %641 = vmatpush.msra.mxu0 %v552
        %642 = vmatpush.msra.mxu0 %v550
        %643 = vmatmul.f32.gmra.mxu0 %v587
        %v644 = vpop.f32.mrf.mxu0
        %v645 = vadd.f32 0.0, %v644
        %646 = vmatmul.f32.gmra.mxu0 %v590
        %v647 = vpop.f32.mrf.mxu0
        %v648 = vadd.f32 0.0, %v647
        %649 = vmatmul.f32.gmra.mxu0 %v593
        %v650 = vpop.f32.mrf.mxu0
        %v651 = vadd.f32 0.0, %v650
        %652 = vmatmul.f32.gmra.mxu0 %v596
        %v653 = vpop.f32.mrf.mxu0
        %v654 = vadd.f32 0.0, %v653
        %655 = vdwg.mxu0
        %656 = vst [vmem:[%s262] sm:$0xff] %v616
        %657 = vst [vmem:[%s262 + $0x8] sm:$0xff] %v645
        %658 = vst [vmem:[%s262 + $0x10] sm:$0xff] %v619
        %659 = vst [vmem:[%s262 + $0x18] sm:$0xff] %v648
        %660 = vst [vmem:[%s262 + $0x20] sm:$0xff] %v622
        %661 = vst [vmem:[%s262 + $0x28] sm:$0xff] %v651
        %662 = vst [vmem:[%s262 + $0x30] sm:$0xff] %v625
        %663 = vst [vmem:[%s262 + $0x38] sm:$0xff] %v654
        %s664 = sand.u32 %s156, 1
        %s665 = scalar_lea.sflag [#allocation4], %s664
        %s666 = sand.u32 %s156, 1
        %s667 = smul.addr %s666, 64
        %s668 = scalar_lea.vmem [#allocation5], %s667
        // Predicated region
        $region45: #{tpu_custom_call.1} parent=39 // pred_check
          %p669 = pneg %p166
        $region46: #{tpu_custom_call.1} parent=39 // pred_check_branch
          %671 = sbr.rel (%p669) target = $region48
        $region47: #{tpu_custom_call.1} parent=39 // pred_region
          %s672 = smul.u32 2, %s27
          %674 = vsyncadd %s665, 0
          %s675 = smul.addr %s26, 8
          %s676 = sadd.s32 %s672, %s675
          %s677 = smul.addr %s676, 8
          %s678 = scalar_lea.hbm %s5, %s677
          %s679 = sshll.u32 %s668, 4
          %s680 = int_to_ptr.vmem [resolvable:$true] %s679
          %s681 = sshll.u32 %s678, 4
          %s682 = int_to_ptr.hbm [resolvable:$true] %s681
          %687 = dma.vmem_to_hbm [thread:$0]  %s680, 1024, %s682, %s665, 256, 256, 16
        $region48: #{tpu_custom_call.1} parent=39 // pred_fallthru
          _
      $region40: #{tpu_custom_call.1} parent=5 // pred_fallthru
        _
      %p688 = scmp.le.s32.totalorder 2, %s17
      // Predicated region
      $region49: #{tpu_custom_call.1} parent=5 // pred_check
        %p689 = pneg %p688
      $region50: #{tpu_custom_call.1} parent=5 // pred_check_branch
        %691 = sbr.rel (%p689) target = $region52
      $region51: #{tpu_custom_call.1} parent=5 // pred_region
        %s692 = ssub.s32 %s17, 2
        // Predicated region
        $region53: #{tpu_custom_call.1} parent=51 // pred_check
          %p693 = pneg %p172
        $region54: #{tpu_custom_call.1} parent=51 // pred_check_branch
          %695 = sbr.rel (%p693) target = $region56
        $region55: #{tpu_custom_call.1} parent=51 // pred_region
          %s696 = sand.u32 %s157, 1
          %s697 = scalar_lea.sflag [#allocation4], %s696
          %s698 = sand.u32 %s157, 1
          %s699 = smul.addr %s698, 64
          %s700 = scalar_lea.vmem [#allocation5], %s699
          %702 = dma.done %s697, 1024
        $region56: #{tpu_custom_call.1} parent=51 // pred_fallthru
          _
      $region52: #{tpu_custom_call.1} parent=5 // pred_fallthru
        _
    $region6: #{tpu_custom_call.1} parent=1 // loop_footer
      %s21 = sadd.s32 1, %s17
    $region7: #{tpu_custom_call.1} parent=1 // loop_footer_branch
      %16 = sbr.rel target = $region3
    $region8: #{tpu_custom_call.1} parent=1 // loop_exit
      _
    %703 = vsyncpa [#allocation3], 1
    %s704 = scalar_lea.sflag [#allocation3], 1
    %705 = vsyncpa %s704, 1
    %706 = vsyncpa [#allocation4], 1
    %s707 = scalar_lea.sflag [#allocation4], 1
    %708 = vsyncpa %s707, 1

</llo_original>
